<compile_context>
chip_gen: v6e
topology: v6e:2x2x1
jax: 0.10.0
libtpu: 0.0.40
codegen_flags: <defaults>
</compile_context>

<pallas_src>
import functools

import jax
import jax.numpy as jnp
from jax.experimental import pallas as pl
from jax.experimental.pallas import tpu as pltpu

N_EMBEDS = 32
DROPOUT = 0.1  # unused at inference (identity)


def _ffn_kernel(x_ref, w1_ref, b1_ref, w2_ref, b2_ref, o_ref):
    # x_ref:  (tm_p, 128)  packed activation rows, original wire dtype (f32)
    # w1_ref: (128, 512)   block-diagonal W1 (compute dtype), VMEM-resident
    # b1_ref: (1, 512)     f32
    # w2_ref: (512, 128)   block-diagonal W2 (compute dtype), VMEM-resident
    # b2_ref: (1, 128)     f32
    # o_ref:  (tm_p, 128)  packed output in the wire dtype (lane-dense stores)
    x = x_ref[...].astype(w1_ref.dtype)            # cast fused in-kernel (VPU filler)
    h = jnp.dot(x, w1_ref[...], preferred_element_type=jnp.float32)
    h = jnp.maximum(h + b1_ref[...], 0.0)          # bias + ReLU in f32 (VPU)
    h = h.astype(w2_ref.dtype)                     # back to compute dtype for the MXU
    y = jnp.dot(h, w2_ref[...], preferred_element_type=jnp.float32)
    o_ref[...] = (y + b2_ref[...]).astype(o_ref.dtype)  # dropout == identity (eval)


def _block_diag(w, pack):
    """Block-diagonal expansion: `pack` copies of w along the diagonal."""
    if pack == 1:
        return w
    fi, fo = w.shape
    eye = jnp.eye(pack, dtype=w.dtype)
    return (eye[:, None, :, None] * w[None, :, None, :]).reshape(pack * fi, pack * fo)


@functools.partial(jax.jit, static_argnames=("block_rows", "compute_dtype"))
def feed_forward(x, w1, b1, w2, b2, *, block_rows=16384, compute_dtype=jnp.bfloat16):
    """x: (..., N_EMBEDS) -> (..., N_EMBEDS), eval-mode FFN (dropout = identity)."""
    orig_shape = x.shape
    out_dtype = x.dtype
    n_emb = w1.shape[0]
    hidden = w1.shape[1]

    # Pack factor: fold `pack` consecutive rows into one 128-lane slab row so
    # every kernel load/store is lane-dense (last dim a multiple of 128).
    if n_emb % 128 == 0:
        pack = 1
    else:
        assert 128 % n_emb == 0, "n_emb must divide 128 or be a multiple of 128"
        pack = 128 // n_emb

    x2d = x.reshape(-1, n_emb)
    m = x2d.shape[0]

    # Pad ONLY to a multiple of `pack` rows (needed for the free row-major
    # reinterpretation into 128-lane slabs).  No full-tile padding: partial
    # trailing grid blocks are clipped/masked by Pallas, and the garbage rows
    # it reads/computes there never reach memory (masked output stores).
    m_ceil = pl.cdiv(m, pack) * pack
    if m_ceil != m:
        x2d = jnp.pad(x2d, ((0, m_ceil - m), (0, 0)))
    m_p = m_ceil // pack                     # packed slab rows
    kin = pack * n_emb                       # 128
    khid = pack * hidden                     # 512

    # Free reinterpretation: (m_ceil, n_emb) row-major == (m_p, pack*n_emb).
    # Wire dtype is left untouched; the bf16 cast happens inside the kernel.
    xp = x2d.reshape(m_p, kin)

    # Row tile: ~4 MiB HBM traffic per grid step by default (f32 in + f32 out),
    # working set ~25 MiB -> fits v7x's 64 MiB VMEM/TC under a 48 MiB limit.
    max_tm_p = max(8, (block_rows // pack) // 8 * 8)     # default 4096 packed rows
    tm_p = min(max_tm_p, pl.cdiv(m_p, 8) * 8)            # don't exceed the data
    # Megacore / pipeline depth: once the input is big enough, prefer >= ~8
    # grid steps (>= 4 per TensorCore on v7x) while keeping >= ~2 MiB per step.
    min_tm_p = 2048
    if m_p >= 8 * min_tm_p:
        tm_p = min(tm_p, max(min_tm_p, (m_p // 8) // 8 * 8))

    # Block-diagonal weights map packed slab rows through plain matmuls with no
    # in-kernel relayout.  Tiny (<=0.5 MiB total), VMEM-resident across steps.
    w1_blk = _block_diag(w1.astype(compute_dtype), pack)   # (kin, khid)
    w2_blk = _block_diag(w2.astype(compute_dtype), pack)   # (khid, kin)
    b1_blk = jnp.tile(b1.astype(jnp.float32), pack).reshape(1, khid)
    b2_blk = jnp.tile(b2.astype(jnp.float32), pack).reshape(1, kin)

    grid = (pl.cdiv(m_p, tm_p),)

    outp = pl.pallas_call(
        _ffn_kernel,
        out_shape=jax.ShapeDtypeStruct((m_p, kin), out_dtype),
        grid_spec=pltpu.PrefetchScalarGridSpec(
            num_scalar_prefetch=0,
            grid=grid,
            in_specs=[
                pl.BlockSpec((tm_p, kin), lambda i: (i, 0)),    # x slab rows
                pl.BlockSpec((kin, khid), lambda i: (0, 0)),    # W1 (resident)
                pl.BlockSpec((1, khid), lambda i: (0, 0)),      # b1 (resident)
                pl.BlockSpec((khid, kin), lambda i: (0, 0)),    # W2 (resident)
                pl.BlockSpec((1, kin), lambda i: (0, 0)),       # b2 (resident)
            ],
            out_specs=pl.BlockSpec((tm_p, kin), lambda i: (i, 0)),
        ),
        compiler_params=pltpu.CompilerParams(
            dimension_semantics=("parallel",),        # megacore-shards rows (v7x)
            vmem_limit_bytes=48 * 1024 * 1024,        # moves together with tm_p
        ),
    )(xp, w1_blk, b1_blk, w2_blk, b2_blk)

    out = outp.reshape(m_ceil, n_emb)
    if m_ceil != m:                                   # only when pack-padding applied
        out = out[:m]
    return out.reshape(orig_shape)


def init_params(key, n_embeds=N_EMBEDS):
    """Deterministic init mirroring nn.Linear's U(-1/sqrt(fan_in), 1/sqrt(fan_in))."""
    k1, k2, k3, k4 = jax.random.split(key, 4)
    hidden = n_embeds * 4
    lim1 = 1.0 / jnp.sqrt(jnp.float32(n_embeds))
    lim2 = 1.0 / jnp.sqrt(jnp.float32(hidden))
    # Stored as (in_features, out_features) == torch weight.T
    w1 = jax.random.uniform(k1, (n_embeds, hidden), jnp.float32, -lim1, lim1)
    b1 = jax.random.uniform(k2, (hidden,), jnp.float32, -lim1, lim1)
    w2 = jax.random.uniform(k3, (hidden, n_embeds), jnp.float32, -lim2, lim2)
    b2 = jax.random.uniform(k4, (n_embeds,), jnp.float32, -lim2, lim2)
    return w1, b1, w2, b2


if __name__ == "__main__":
    key = jax.random.PRNGKey(0)
    k_x, k_p = jax.random.split(key)

    # (batch=2, seq=8, n_embeds=32), matching a transformer block's FFN input.
    x = jax.random.normal(k_x, (2, 8, N_EMBEDS), dtype=jnp.float32)
    w1, b1, w2, b2 = init_params(k_p)

    y = feed_forward(x, w1, b1, w2, b2)
    y = jax.block_until_ready(y)
    assert y.shape == x.shape and y.dtype == x.dtype

    # Reference 1: same math / same bf16 casts as the kernel (tight tolerance).
    xb = x.reshape(-1, N_EMBEDS).astype(jnp.bfloat16)
    h = jnp.dot(xb, w1.astype(jnp.bfloat16), preferred_element_type=jnp.float32) + b1
    h = jnp.maximum(h, 0.0).astype(jnp.bfloat16)
    ref_bf16 = (jnp.dot(h, w2.astype(jnp.bfloat16), preferred_element_type=jnp.float32)
                + b2).reshape(x.shape)
    assert jnp.allclose(y, ref_bf16, atol=1e-3, rtol=1e-3)

    # Reference 2: pure f32 module semantics (loose tolerance for bf16 compute).
    ref_f32 = (jnp.maximum(x.reshape(-1, N_EMBEDS) @ w1 + b1, 0.0) @ w2 + b2).reshape(x.shape)
    assert jnp.allclose(y, ref_f32, atol=1e-1)

    # Exercise the pack-padding + partial trailing block path (rows % 4 != 0).
    x_odd = jax.random.normal(k_x, (3, 7, N_EMBEDS), dtype=jnp.float32)
    y_odd = jax.block_until_ready(feed_forward(x_odd, w1, b1, w2, b2))
    ref_odd = (jnp.maximum(x_odd.reshape(-1, N_EMBEDS) @ w1 + b1, 0.0) @ w2
               + b2).reshape(x_odd.shape)
    assert y_odd.shape == x_odd.shape and y_odd.dtype == x_odd.dtype
    assert jnp.allclose(y_odd, ref_odd, atol=1e-1)

    print("KERNEL_OK")
</pallas_src>

<mosaic_0001>
module attributes {stable_mosaic.version = 11 : i64} {
  func.func @_ffn_kernel(%arg0: i32, %arg1: memref<8x128xf32, #tpu.memory_space<vmem>>, %arg2: memref<128x512xbf16, #tpu.memory_space<vmem>>, %arg3: memref<1x512xf32, #tpu.memory_space<vmem>>, %arg4: memref<512x128xbf16, #tpu.memory_space<vmem>>, %arg5: memref<1x128xf32, #tpu.memory_space<vmem>>, %arg6: memref<8x128xf32, #tpu.memory_space<vmem>>) attributes {dimension_semantics = [#tpu.dimension_semantics<parallel>], iteration_bounds = array<i64: 1>, scalar_prefetch = 0 : i64, scratch_operands = 0 : i64, tpu.core_type = #tpu.core_type<tc>, window_params = [{transform_indices = @transform_0, window_bounds = array<i64: 8, 128>}, {pipeline_mode = #tpu.pipeline_mode<synchronous>, transform_indices = @transform_1, window_bounds = array<i64: 128, 512>}, {pipeline_mode = #tpu.pipeline_mode<synchronous>, transform_indices = @transform_2, window_bounds = array<i64: 1, 512>}, {pipeline_mode = #tpu.pipeline_mode<synchronous>, transform_indices = @transform_3, window_bounds = array<i64: 512, 128>}, {pipeline_mode = #tpu.pipeline_mode<synchronous>, transform_indices = @transform_4, window_bounds = array<i64: 1, 128>}, {transform_indices = @transform_5, window_bounds = array<i64: 8, 128>}]} {
    %c0 = arith.constant 0 : index
    %c0_0 = arith.constant 0 : index
    %0 = vector.load %arg1[%c0, %c0_0] : memref<8x128xf32, #tpu.memory_space<vmem>>, vector<8x128xf32>
    %1 = arith.truncf %0 : vector<8x128xf32> to vector<8x128xbf16>
    %c0_1 = arith.constant 0 : index
    %c0_2 = arith.constant 0 : index
    %2 = vector.load %arg2[%c0_1, %c0_2] : memref<128x512xbf16, #tpu.memory_space<vmem>>, vector<128x512xbf16>
    %cst = arith.constant dense<0.000000e+00> : vector<8x512xf32>
    %3 = tpu.matmul %1, %2, %cst {dimension_numbers = #tpu.dot_dimension_numbers<[1], [0], [0], [1], [0, 0, 1, 1], [], []>} : vector<8x128xbf16>, vector<128x512xbf16>, vector<8x512xf32> -> vector<8x512xf32>
    %c0_3 = arith.constant 0 : index
    %c0_4 = arith.constant 0 : index
    %4 = vector.load %arg3[%c0_3, %c0_4] : memref<1x512xf32, #tpu.memory_space<vmem>>, vector<1x512xf32>
    %5 = vector.broadcast %4 : vector<1x512xf32> to vector<8x512xf32>
    %6 = arith.addf %3, %5 : vector<8x512xf32>
    %cst_5 = arith.constant 0.000000e+00 : f32
    %7 = vector.broadcast %cst_5 : f32 to vector<8x512xf32>
    %8 = arith.maximumf %6, %7 : vector<8x512xf32>
    %9 = arith.truncf %8 : vector<8x512xf32> to vector<8x512xbf16>
    %c0_6 = arith.constant 0 : index
    %c0_7 = arith.constant 0 : index
    %10 = vector.load %arg4[%c0_6, %c0_7] : memref<512x128xbf16, #tpu.memory_space<vmem>>, vector<512x128xbf16>
    %cst_8 = arith.constant dense<0.000000e+00> : vector<8x128xf32>
    %11 = tpu.matmul %9, %10, %cst_8 {dimension_numbers = #tpu.dot_dimension_numbers<[1], [0], [0], [1], [0, 0, 1, 1], [], []>} : vector<8x512xbf16>, vector<512x128xbf16>, vector<8x128xf32> -> vector<8x128xf32>
    %c0_9 = arith.constant 0 : index
    %c0_10 = arith.constant 0 : index
    %12 = vector.load %arg5[%c0_9, %c0_10] : memref<1x128xf32, #tpu.memory_space<vmem>>, vector<1x128xf32>
    %13 = vector.broadcast %12 : vector<1x128xf32> to vector<8x128xf32>
    %14 = arith.addf %11, %13 : vector<8x128xf32>
    %c0_11 = arith.constant 0 : index
    %c0_12 = arith.constant 0 : index
    %15 = vector.load %arg6[%c0_11, %c0_12] : memref<8x128xf32, #tpu.memory_space<vmem>>, vector<8x128xf32>
    tpu.vector_store %arg6[%c0_11, %c0_12], %14 {strides = array<i32>} : memref<8x128xf32, #tpu.memory_space<vmem>>, vector<8x128xf32>,
    return
  }
  func.func @transform_0(%arg0: i32) -> (i32, i32) {
    %c0_i32 = arith.constant 0 : i32
    %c0_i32_0 = arith.constant 0 : i32
    return %arg0, %c0_i32 : i32, i32
  }
  func.func @transform_1(%arg0: i32) -> (i32, i32) {
    %c0_i32 = arith.constant 0 : i32
    %c0_i32_0 = arith.constant 0 : i32
    %c0_i32_1 = arith.constant 0 : i32
    return %c0_i32, %c0_i32_0 : i32, i32
  }
  func.func @transform_2(%arg0: i32) -> (i32, i32) {
    %c0_i32 = arith.constant 0 : i32
    %c0_i32_0 = arith.constant 0 : i32
    %c0_i32_1 = arith.constant 0 : i32
    return %c0_i32, %c0_i32_0 : i32, i32
  }
  func.func @transform_3(%arg0: i32) -> (i32, i32) {
    %c0_i32 = arith.constant 0 : i32
    %c0_i32_0 = arith.constant 0 : i32
    %c0_i32_1 = arith.constant 0 : i32
    return %c0_i32, %c0_i32_0 : i32, i32
  }
  func.func @transform_4(%arg0: i32) -> (i32, i32) {
    %c0_i32 = arith.constant 0 : i32
    %c0_i32_0 = arith.constant 0 : i32
    %c0_i32_1 = arith.constant 0 : i32
    return %c0_i32, %c0_i32_0 : i32, i32
  }
  func.func @transform_5(%arg0: i32) -> (i32, i32) {
    %c0_i32 = arith.constant 0 : i32
    %c0_i32_0 = arith.constant 0 : i32
    return %arg0, %c0_i32 : i32, i32
  }
}

</mosaic_0001>

<llo_original>
// kernel: tile.18
$region0: #{tile.18}
  #allocation0 [shape = 's32[1]{0}', space=sflag, size = 0x4, scoped, tag = 'scoped memory for tile.18']
  %s0 = inlined_call_operand.vmem [shape: f32[32], index: 0, kind: input, shape index: {}]
  %s1 = inlined_call_operand.vmem [shape: f32[4,32], index: 1, kind: output, shape index: {}]
  // Predicated region
  $region2: #{tile.18} parent=0 // pred_check
    _
  $region3: #{tile.18} parent=0 // pred_check_branch
    %3 = sbr.rel (0) target = $region5
  $region4: #{tile.18} parent=0 // pred_region
    _
  $region5: #{tile.18} parent=0 // pred_fallthru
    _
  %v4 = vld [vmem:[%s0] ss:$0 sm:$0xff]
  %5 = vst [vmem:[%s1] sm:$0xf] %v4

// kernel: tile.19
$region0: #{tile.19}
  %s0 = inlined_call_operand.vmem [shape: f32[4,32], index: 0, kind: input, shape index: {}]
  %s1 = inlined_call_operand.vmem [shape: f32[1,128], index: 1, kind: output, shape index: {}]
  $region1: #{tile.19} parent=0
    #allocation0 [shape = 'u8[4096]{0}', space=vmem, size = 0x1000, scoped, tag = 'scoped mem for output reshape']
    #allocation1 [shape = 'u8[4096]{0}', space=vmem, size = 0x1000, scoped, tag = 'scoped mem for input reshape']
    %s3 = sshll.u32 1, 4
    %s4 = ssub.s32 %s3, 1
    %v5 = vld [vmem:[%s0] sm:%s4]
    %6 = vst [vmem:[#allocation1] sm:%s4] %v5
    %v7 = vld [vmem:[#allocation1] sm:$0x1]
    %vm8 = vcmask 261120
    %9 = vst.msk [vmem:[#allocation0] sm:$0x1] %vm8, %v7
    %s10 = scalar_lea.vmem [#allocation1], 3
    %v11 = vld [vmem:[%s10] sm:$0x1]
    %12 = vrot.lane.b32.xlu0 %v11, 96
    %v13 = vpop.permute.xlu0 %12
    %vm14 = vcmask 1048320
    %15 = vst.msk [vmem:[#allocation0] sm:$0x1] %vm14, %v13
    %s16 = scalar_lea.vmem [#allocation1], 2
    %v17 = vld [vmem:[%s16] sm:$0x1]
    %18 = vrot.lane.b32.xlu0 %v17, 64
    %v19 = vpop.permute.xlu0 %18
    %vm20 = vcmask 785920
    %21 = vst.msk [vmem:[#allocation0] sm:$0x1] %vm20, %v19
    %s22 = scalar_lea.vmem [#allocation1], 1
    %v23 = vld [vmem:[%s22] sm:$0x1]
    %24 = vrot.lane.b32.xlu0 %v23, 32
    %v25 = vpop.permute.xlu0 %24
    %vm26 = vcmask 523520
    %27 = vst.msk [vmem:[#allocation0] sm:$0x1] %vm26, %v25
    %s29 = sshll.u32 1, 1
    %s30 = ssub.s32 %s29, 1
    %v32 = vld [vmem:[#allocation0] sm:%s30]
    %s33 = sshll.u32 1, 1
    %s34 = ssub.s32 %s33, 1
    %35 = vst [vmem:[%s1] sm:%s34] %v32

// kernel: tile.13
$region0: #{tile.13}
  #allocation0 [shape = 's32[1]{0}', space=sflag, size = 0x4, scoped, tag = 'scoped memory for tile.13']
  %s0 = inlined_call_operand.vmem [shape: f32[128], index: 0, kind: input, shape index: {}]
  %s1 = inlined_call_operand.vmem [shape: f32[4,128], index: 1, kind: output, shape index: {}]
  // Predicated region
  $region2: #{tile.13} parent=0 // pred_check
    _
  $region3: #{tile.13} parent=0 // pred_check_branch
    %3 = sbr.rel (0) target = $region5
  $region4: #{tile.13} parent=0 // pred_region
    _
  $region5: #{tile.13} parent=0 // pred_fallthru
    _
  %v4 = vld [vmem:[%s0] ss:$0 sm:$0xff]
  %5 = vst [vmem:[%s1] sm:$0xf] %v4

// kernel: feed_forward.1
$region0: #{feed_forward.1}
  #allocation0 [shape = 'u32[]', space=smem, size = 0x4, offset = 0x4, fixed_abs, tag = 'smem constant byte address 0x4 - core index']
  #allocation1 [shape = 'u32[144,128]{1,0:T(1,128)}', space=vmem, size = 0x12000, scoped, tag = 'internal scratch']
  %s0 = inlined_call_operand.vmem [shape: f32[4,128], index: 0, kind: input, shape index: {}]
  %s1 = inlined_call_operand.vmem [shape: bf16[128,512], index: 1, kind: input, shape index: {}]
  %s2 = inlined_call_operand.vmem [shape: f32[1,512], index: 2, kind: input, shape index: {}]
  %s3 = inlined_call_operand.vmem [shape: bf16[512,128], index: 3, kind: input, shape index: {}]
  %s4 = inlined_call_operand.vmem [shape: f32[1,128], index: 4, kind: input, shape index: {}]
  %s5 = inlined_call_operand.vmem [shape: f32[4,128], index: 5, kind: output, shape index: {}]
  %s6 = sld [smem:[#allocation0]]
  $region60: #{feed_forward.1} parent=0
    _
  %s8 = ssub.s32 1, %s6
  %s9 = scalar_select 0, %s8, %s6
  $region1: #{feed_forward.1} parent=0
    #allocation2 [shape = 'u8[4096]{0}', space=vmem, size = 0x1000, scoped, tag = 'output window, operand 0, single buffered']
    // Predicated region
    $region2: #{feed_forward.1} parent=1 // pred_check
      _
    $region3: #{feed_forward.1} parent=1 // pred_check_branch
      %11 = sbr.rel (0) target = $region5
    $region4: #{feed_forward.1} parent=1 // pred_region
      _
    $region5: #{feed_forward.1} parent=1 // pred_fallthru
      _
    // Predicated region
    $region6: #{feed_forward.1} parent=1 // pred_check
      _
    $region7: #{feed_forward.1} parent=1 // pred_check_branch
      %13 = sbr.rel (0) target = $region9
    $region8: #{feed_forward.1} parent=1 // pred_region
      _
    $region9: #{feed_forward.1} parent=1 // pred_fallthru
      _
    // Predicated region
    $region10: #{feed_forward.1} parent=1 // pred_check
      _
    $region11: #{feed_forward.1} parent=1 // pred_check_branch
      %15 = sbr.rel (0) target = $region13
    $region12: #{feed_forward.1} parent=1 // pred_region
      _
    $region13: #{feed_forward.1} parent=1 // pred_fallthru
      _
    // Predicated region
    $region14: #{feed_forward.1} parent=1 // pred_check
      _
    $region15: #{feed_forward.1} parent=1 // pred_check_branch
      %17 = sbr.rel (0) target = $region17
    $region16: #{feed_forward.1} parent=1 // pred_region
      _
    $region17: #{feed_forward.1} parent=1 // pred_fallthru
      _
    // Predicated region
    $region18: #{feed_forward.1} parent=1 // pred_check
      _
    $region19: #{feed_forward.1} parent=1 // pred_check_branch
      %19 = sbr.rel (0) target = $region21
    $region20: #{feed_forward.1} parent=1 // pred_region
      _
    $region21: #{feed_forward.1} parent=1 // pred_fallthru
      _
    %v21 = vld [vmem:[%s0] sm:$0xff]
    %v22 = vpack.c.bf16 %v21, %v21
    %v23 = vld [vmem:[%s1] sm:$0xff]
    %v24 = vld [vmem:[%s1 + $0x8] sm:$0xff]
    %v25 = vld [vmem:[%s1 + $0x10] sm:$0xff]
    %v26 = vld [vmem:[%s1 + $0x18] sm:$0xff]
    %v27 = vld [vmem:[%s1 + $0x20] sm:$0xff]
    %v28 = vld [vmem:[%s1 + $0x28] sm:$0xff]
    %v29 = vld [vmem:[%s1 + $0x30] sm:$0xff]
    %v30 = vld [vmem:[%s1 + $0x38] sm:$0xff]
    %v31 = vld [vmem:[%s1 + $0x40] sm:$0xff]
    %v32 = vld [vmem:[%s1 + $0x48] sm:$0xff]
    %v33 = vld [vmem:[%s1 + $0x50] sm:$0xff]
    %v34 = vld [vmem:[%s1 + $0x58] sm:$0xff]
    %v35 = vld [vmem:[%s1 + $0x60] sm:$0xff]
    %v36 = vld [vmem:[%s1 + $0x68] sm:$0xff]
    %v37 = vld [vmem:[%s1 + $0x70] sm:$0xff]
    %v38 = vld [vmem:[%s1 + $0x78] sm:$0xff]
    %v39 = vld [vmem:[%s1 + $0x80] sm:$0xff]
    %v40 = vld [vmem:[%s1 + $0x88] sm:$0xff]
    %v41 = vld [vmem:[%s1 + $0x90] sm:$0xff]
    %v42 = vld [vmem:[%s1 + $0x98] sm:$0xff]
    %v43 = vld [vmem:[%s1 + $0xa0] sm:$0xff]
    %v44 = vld [vmem:[%s1 + $0xa8] sm:$0xff]
    %v45 = vld [vmem:[%s1 + $0xb0] sm:$0xff]
    %v46 = vld [vmem:[%s1 + $0xb8] sm:$0xff]
    %v47 = vld [vmem:[%s1 + $0xc0] sm:$0xff]
    %v48 = vld [vmem:[%s1 + $0xc8] sm:$0xff]
    %v49 = vld [vmem:[%s1 + $0xd0] sm:$0xff]
    %v50 = vld [vmem:[%s1 + $0xd8] sm:$0xff]
    %v51 = vld [vmem:[%s1 + $0xe0] sm:$0xff]
    %v52 = vld [vmem:[%s1 + $0xe8] sm:$0xff]
    %v53 = vld [vmem:[%s1 + $0xf0] sm:$0xff]
    %v54 = vld [vmem:[%s1 + $0xf8] sm:$0xff]
    %v55 = vld [vmem:[%s2] sm:$0xf]
    %v57 = vlaneseq
    %v58 = vshrl.u32 %v57, 7
    %v59 = vsub.s32 0, %v58
    %v60 = vrot.slane %v55, %v59
    %v61 = vlaneseq
    %v62 = vshrl.u32 %v61, 7
    %v63 = vsub.s32 1, %v62
    %v64 = vrot.slane %v55, %v63
    %v65 = vlaneseq
    %v66 = vshrl.u32 %v65, 7
    %v67 = vsub.s32 2, %v66
    %v68 = vrot.slane %v55, %v67
    %v69 = vlaneseq
    %v70 = vshrl.u32 %v69, 7
    %v71 = vsub.s32 3, %v70
    %v72 = vrot.slane %v55, %v71
    %v109 = vunpack.c.l.b16 %v23
    %v110 = vunpack.c.h.b16 %v23
    %v111 = vunpack.c.l.b16 %v24
    %v112 = vunpack.c.h.b16 %v24
    %v113 = vunpack.c.l.b16 %v25
    %v114 = vunpack.c.h.b16 %v25
    %v115 = vunpack.c.l.b16 %v26
    %v116 = vunpack.c.h.b16 %v26
    %v117 = vunpack.c.l.b16 %v27
    %v118 = vunpack.c.h.b16 %v27
    %v119 = vunpack.c.l.b16 %v28
    %v120 = vunpack.c.h.b16 %v28
    %v121 = vunpack.c.l.b16 %v29
    %v122 = vunpack.c.h.b16 %v29
    %v123 = vunpack.c.l.b16 %v30
    %v124 = vunpack.c.h.b16 %v30
    %v125 = vunpack.c.l.b16 %v31
    %v126 = vunpack.c.h.b16 %v31
    %v127 = vunpack.c.l.b16 %v32
    %v128 = vunpack.c.h.b16 %v32
    %v129 = vunpack.c.l.b16 %v33
    %v130 = vunpack.c.h.b16 %v33
    %v131 = vunpack.c.l.b16 %v34
    %v132 = vunpack.c.h.b16 %v34
    %v133 = vunpack.c.l.b16 %v35
    %v134 = vunpack.c.h.b16 %v35
    %v135 = vunpack.c.l.b16 %v36
    %v136 = vunpack.c.h.b16 %v36
    %v137 = vunpack.c.l.b16 %v37
    %v138 = vunpack.c.h.b16 %v37
    %v139 = vunpack.c.l.b16 %v38
    %v140 = vunpack.c.h.b16 %v38
    %v141 = vunpack.c.l.b16 %v39
    %v142 = vunpack.c.h.b16 %v39
    %v143 = vunpack.c.l.b16 %v40
    %v144 = vunpack.c.h.b16 %v40
    %v145 = vunpack.c.l.b16 %v41
    %v146 = vunpack.c.h.b16 %v41
    %v147 = vunpack.c.l.b16 %v42
    %v148 = vunpack.c.h.b16 %v42
    %v149 = vunpack.c.l.b16 %v43
    %v150 = vunpack.c.h.b16 %v43
    %v151 = vunpack.c.l.b16 %v44
    %v152 = vunpack.c.h.b16 %v44
    %v153 = vunpack.c.l.b16 %v45
    %v154 = vunpack.c.h.b16 %v45
    %v155 = vunpack.c.l.b16 %v46
    %v156 = vunpack.c.h.b16 %v46
    %v157 = vunpack.c.l.b16 %v47
    %v158 = vunpack.c.h.b16 %v47
    %v159 = vunpack.c.l.b16 %v48
    %v160 = vunpack.c.h.b16 %v48
    %v161 = vunpack.c.l.b16 %v49
    %v162 = vunpack.c.h.b16 %v49
    %v163 = vunpack.c.l.b16 %v50
    %v164 = vunpack.c.h.b16 %v50
    %v165 = vunpack.c.l.b16 %v51
    %v166 = vunpack.c.h.b16 %v51
    %v167 = vunpack.c.l.b16 %v52
    %v168 = vunpack.c.h.b16 %v52
    %v169 = vunpack.c.l.b16 %v53
    %v170 = vunpack.c.h.b16 %v53
    %v171 = vunpack.c.l.b16 %v54
    %v172 = vunpack.c.h.b16 %v54
    %v173 = vpack.c.b16 %v113, %v109
    %v174 = vpack.c.b16 %v114, %v110
    %v175 = vpack.c.b16 %v115, %v111
    %v176 = vpack.c.b16 %v116, %v112
    %v177 = vpack.c.b16 %v121, %v117
    %v178 = vpack.c.b16 %v122, %v118
    %v179 = vpack.c.b16 %v123, %v119
    %v180 = vpack.c.b16 %v124, %v120
    %v181 = vpack.c.b16 %v129, %v125
    %v182 = vpack.c.b16 %v130, %v126
    %v183 = vpack.c.b16 %v131, %v127
    %v184 = vpack.c.b16 %v132, %v128
    %v185 = vpack.c.b16 %v137, %v133
    %v186 = vpack.c.b16 %v138, %v134
    %v187 = vpack.c.b16 %v139, %v135
    %v188 = vpack.c.b16 %v140, %v136
    %v189 = vpack.c.b16 %v145, %v141
    %v190 = vpack.c.b16 %v146, %v142
    %v191 = vpack.c.b16 %v147, %v143
    %v192 = vpack.c.b16 %v148, %v144
    %v193 = vpack.c.b16 %v153, %v149
    %v194 = vpack.c.b16 %v154, %v150
    %v195 = vpack.c.b16 %v155, %v151
    %v196 = vpack.c.b16 %v156, %v152
    %v197 = vpack.c.b16 %v161, %v157
    %v198 = vpack.c.b16 %v162, %v158
    %v199 = vpack.c.b16 %v163, %v159
    %v200 = vpack.c.b16 %v164, %v160
    %v201 = vpack.c.b16 %v169, %v165
    %v202 = vpack.c.b16 %v170, %v166
    %v203 = vpack.c.b16 %v171, %v167
    %v204 = vpack.c.b16 %v172, %v168
    %237 = vmatprep.subr.bf16.mxu0 %v202
    %238 = vmatpush1.bf16.msra.mxu0 %v201
    %239 = vmatprep.subr.bf16.mxu0 %v198
    %240 = vmatpush1.bf16.msra.mxu0 %v197
    %241 = vmatprep.subr.bf16.mxu0 %v194
    %242 = vmatpush1.bf16.msra.mxu0 %v193
    %243 = vmatprep.subr.bf16.mxu0 %v190
    %244 = vmatpush1.bf16.msra.mxu0 %v189
    %245 = vmatprep.subr.bf16.mxu0 %v186
    %246 = vmatpush1.bf16.msra.mxu0 %v185
    %247 = vmatprep.subr.bf16.mxu0 %v182
    %248 = vmatpush1.bf16.msra.mxu0 %v181
    %249 = vmatprep.subr.bf16.mxu0 %v178
    %250 = vmatpush1.bf16.msra.mxu0 %v177
    %251 = vmatprep.subr.bf16.mxu0 %v174
    %252 = vmatpush1.bf16.msra.mxu0 %v173
    %253 = vmatprep.subr.bf16.mxu0 0
    %254 = vmatpush2.bf16.msra.mxu0 0
    %255 = vmatprep.subr.bf16.mxu0 0
    %256 = vmatpush2.bf16.msra.mxu0 0
    %257 = vmatprep.subr.bf16.mxu0 0
    %258 = vmatpush2.bf16.msra.mxu0 0
    %259 = vmatprep.subr.bf16.mxu0 0
    %260 = vmatpush2.bf16.msra.mxu0 0
    %261 = vmatprep.subr.bf16.mxu0 0
    %262 = vmatpush2.bf16.msra.mxu0 0
    %263 = vmatprep.subr.bf16.mxu0 0
    %264 = vmatpush2.bf16.msra.mxu0 0
    %265 = vmatprep.subr.bf16.mxu0 0
    %266 = vmatpush2.bf16.msra.mxu0 0
    %267 = vmatprep.subr.bf16.mxu0 0
    %268 = vmatpush2.bf16.msra.mxu0 0
    %269 = vmatprep.mubr.bf16.mxu0 0
    %270 = vmatmul.mubr.bf16.gmra.mxu0 %v22
    %v271 = vpop.f32.mrf.mxu0
    %v272 = vadd.f32 %v60, %v271
    %v273 = vpop.f32.mrf.mxu0
    %v274 = vadd.f32 %v64, %v273
    %v275 = vpop.f32.mrf.mxu0
    %v276 = vpop.f32.mrf.mxu0
    %277 = vdwg.mxu0
    %278 = vmatprep.subr.bf16.mxu0 %v204
    %279 = vmatpush1.bf16.msra.mxu0 %v203
    %280 = vmatprep.subr.bf16.mxu0 %v200
    %281 = vmatpush1.bf16.msra.mxu0 %v199
    %282 = vmatprep.subr.bf16.mxu0 %v196
    %283 = vmatpush1.bf16.msra.mxu0 %v195
    %284 = vmatprep.subr.bf16.mxu0 %v192
    %285 = vmatpush1.bf16.msra.mxu0 %v191
    %286 = vmatprep.subr.bf16.mxu0 %v188
    %287 = vmatpush1.bf16.msra.mxu0 %v187
    %288 = vmatprep.subr.bf16.mxu0 %v184
    %289 = vmatpush1.bf16.msra.mxu0 %v183
    %290 = vmatprep.subr.bf16.mxu0 %v180
    %291 = vmatpush1.bf16.msra.mxu0 %v179
    %292 = vmatprep.subr.bf16.mxu0 %v176
    %293 = vmatpush1.bf16.msra.mxu0 %v175
    %294 = vmatprep.subr.bf16.mxu0 0
    %295 = vmatpush2.bf16.msra.mxu0 0
    %296 = vmatprep.subr.bf16.mxu0 0
    %297 = vmatpush2.bf16.msra.mxu0 0
    %298 = vmatprep.subr.bf16.mxu0 0
    %299 = vmatpush2.bf16.msra.mxu0 0
    %300 = vmatprep.subr.bf16.mxu0 0
    %301 = vmatpush2.bf16.msra.mxu0 0
    %302 = vmatprep.subr.bf16.mxu0 0
    %303 = vmatpush2.bf16.msra.mxu0 0
    %304 = vmatprep.subr.bf16.mxu0 0
    %305 = vmatpush2.bf16.msra.mxu0 0
    %306 = vmatprep.subr.bf16.mxu0 0
    %307 = vmatpush2.bf16.msra.mxu0 0
    %308 = vmatprep.subr.bf16.mxu0 0
    %309 = vmatpush2.bf16.msra.mxu0 0
    %310 = vmatprep.mubr.bf16.mxu0 0
    %311 = vmatmul.mubr.bf16.gmra.mxu0 %v22
    %v312 = vpop.f32.mrf.mxu0
    %v313 = vadd.f32 %v68, %v312
    %v314 = vpop.f32.mrf.mxu0
    %v315 = vadd.f32 %v72, %v314
    %v316 = vpop.f32.mrf.mxu0
    %v317 = vpop.f32.mrf.mxu0
    %318 = vdwg.mxu0
    %v319 = vmax.f32 %v272, 0.0
    %v320 = vmax.f32 %v274, 0.0
    %v321 = vmax.f32 %v313, 0.0
    %v322 = vmax.f32 %v315, 0.0
    %v323 = vpack.c.bf16 %v319, %v319
    %v324 = vpack.c.bf16 %v320, %v320
    %v325 = vpack.c.bf16 %v321, %v321
    %v326 = vpack.c.bf16 %v322, %v322
    %v327 = vld [vmem:[%s3] sm:$0xf]
    %v328 = vld [vmem:[%s3 + $0x4] sm:$0xf]
    %v329 = vld [vmem:[%s3 + $0x8] sm:$0xf]
    %v330 = vld [vmem:[%s3 + $0xc] sm:$0xf]
    %v331 = vld [vmem:[%s3 + $0x10] sm:$0xf]
    %v332 = vld [vmem:[%s3 + $0x14] sm:$0xf]
    %v333 = vld [vmem:[%s3 + $0x18] sm:$0xf]
    %v334 = vld [vmem:[%s3 + $0x1c] sm:$0xf]
    %v335 = vld [vmem:[%s3 + $0x20] sm:$0xf]
    %v336 = vld [vmem:[%s3 + $0x24] sm:$0xf]
    %v337 = vld [vmem:[%s3 + $0x28] sm:$0xf]
    %v338 = vld [vmem:[%s3 + $0x2c] sm:$0xf]
    %v339 = vld [vmem:[%s3 + $0x30] sm:$0xf]
    %v340 = vld [vmem:[%s3 + $0x34] sm:$0xf]
    %v341 = vld [vmem:[%s3 + $0x38] sm:$0xf]
    %v342 = vld [vmem:[%s3 + $0x3c] sm:$0xf]
    %v343 = vld [vmem:[%s3 + $0x40] sm:$0xf]
    %v344 = vld [vmem:[%s3 + $0x44] sm:$0xf]
    %v345 = vld [vmem:[%s3 + $0x48] sm:$0xf]
    %v346 = vld [vmem:[%s3 + $0x4c] sm:$0xf]
    %v347 = vld [vmem:[%s3 + $0x50] sm:$0xf]
    %v348 = vld [vmem:[%s3 + $0x54] sm:$0xf]
    %v349 = vld [vmem:[%s3 + $0x58] sm:$0xf]
    %v350 = vld [vmem:[%s3 + $0x5c] sm:$0xf]
    %v351 = vld [vmem:[%s3 + $0x60] sm:$0xf]
    %v352 = vld [vmem:[%s3 + $0x64] sm:$0xf]
    %v353 = vld [vmem:[%s3 + $0x68] sm:$0xf]
    %v354 = vld [vmem:[%s3 + $0x6c] sm:$0xf]
    %v355 = vld [vmem:[%s3 + $0x70] sm:$0xf]
    %v356 = vld [vmem:[%s3 + $0x74] sm:$0xf]
    %v357 = vld [vmem:[%s3 + $0x78] sm:$0xf]
    %v358 = vld [vmem:[%s3 + $0x7c] sm:$0xf]
    %v359 = vld [vmem:[%s3 + $0x80] sm:$0xf]
    %v360 = vld [vmem:[%s3 + $0x84] sm:$0xf]
    %v361 = vld [vmem:[%s3 + $0x88] sm:$0xf]
    %v362 = vld [vmem:[%s3 + $0x8c] sm:$0xf]
    %v363 = vld [vmem:[%s3 + $0x90] sm:$0xf]
    %v364 = vld [vmem:[%s3 + $0x94] sm:$0xf]
    %v365 = vld [vmem:[%s3 + $0x98] sm:$0xf]
    %v366 = vld [vmem:[%s3 + $0x9c] sm:$0xf]
    %v367 = vld [vmem:[%s3 + $0xa0] sm:$0xf]
    %v368 = vld [vmem:[%s3 + $0xa4] sm:$0xf]
    %v369 = vld [vmem:[%s3 + $0xa8] sm:$0xf]
    %v370 = vld [vmem:[%s3 + $0xac] sm:$0xf]
    %v371 = vld [vmem:[%s3 + $0xb0] sm:$0xf]
    %v372 = vld [vmem:[%s3 + $0xb4] sm:$0xf]
    %v373 = vld [vmem:[%s3 + $0xb8] sm:$0xf]
    %v374 = vld [vmem:[%s3 + $0xbc] sm:$0xf]
    %v375 = vld [vmem:[%s3 + $0xc0] sm:$0xf]
    %v376 = vld [vmem:[%s3 + $0xc4] sm:$0xf]
    %v377 = vld [vmem:[%s3 + $0xc8] sm:$0xf]
    %v378 = vld [vmem:[%s3 + $0xcc] sm:$0xf]
    %v379 = vld [vmem:[%s3 + $0xd0] sm:$0xf]
    %v380 = vld [vmem:[%s3 + $0xd4] sm:$0xf]
    %v381 = vld [vmem:[%s3 + $0xd8] sm:$0xf]
    %v382 = vld [vmem:[%s3 + $0xdc] sm:$0xf]
    %v383 = vld [vmem:[%s3 + $0xe0] sm:$0xf]
    %v384 = vld [vmem:[%s3 + $0xe4] sm:$0xf]
    %v385 = vld [vmem:[%s3 + $0xe8] sm:$0xf]
    %v386 = vld [vmem:[%s3 + $0xec] sm:$0xf]
    %v387 = vld [vmem:[%s3 + $0xf0] sm:$0xf]
    %v388 = vld [vmem:[%s3 + $0xf4] sm:$0xf]
    %v389 = vld [vmem:[%s3 + $0xf8] sm:$0xf]
    %v390 = vld [vmem:[%s3 + $0xfc] sm:$0xf]
    %v391 = vld [vmem:[%s4] sm:$0x1]
    %v393 = vlaneseq
    %v394 = vshrl.u32 %v393, 7
    %v395 = vsub.s32 0, %v394
    %v396 = vrot.slane %v391, %v395
    %v462 = vunpack.c.l.b16 %v327
    %v463 = vunpack.c.l.b16 %v328
    %v464 = vunpack.c.l.b16 %v329
    %v465 = vunpack.c.l.b16 %v330
    %v466 = vunpack.c.l.b16 %v331
    %v467 = vunpack.c.l.b16 %v332
    %v468 = vunpack.c.l.b16 %v333
    %v469 = vunpack.c.l.b16 %v334
    %v470 = vunpack.c.l.b16 %v335
    %v471 = vunpack.c.l.b16 %v336
    %v472 = vunpack.c.l.b16 %v337
    %v473 = vunpack.c.l.b16 %v338
    %v474 = vunpack.c.l.b16 %v339
    %v475 = vunpack.c.l.b16 %v340
    %v476 = vunpack.c.l.b16 %v341
    %v477 = vunpack.c.l.b16 %v342
    %v478 = vunpack.c.l.b16 %v343
    %v479 = vunpack.c.l.b16 %v344
    %v480 = vunpack.c.l.b16 %v345
    %v481 = vunpack.c.l.b16 %v346
    %v482 = vunpack.c.l.b16 %v347
    %v483 = vunpack.c.l.b16 %v348
    %v484 = vunpack.c.l.b16 %v349
    %v485 = vunpack.c.l.b16 %v350
    %v486 = vunpack.c.l.b16 %v351
    %v487 = vunpack.c.l.b16 %v352
    %v488 = vunpack.c.l.b16 %v353
    %v489 = vunpack.c.l.b16 %v354
    %v490 = vunpack.c.l.b16 %v355
    %v491 = vunpack.c.l.b16 %v356
    %v492 = vunpack.c.l.b16 %v357
    %v493 = vunpack.c.l.b16 %v358
    %v494 = vunpack.c.l.b16 %v359
    %v495 = vunpack.c.l.b16 %v360
    %v496 = vunpack.c.l.b16 %v361
    %v497 = vunpack.c.l.b16 %v362
    %v498 = vunpack.c.l.b16 %v363
    %v499 = vunpack.c.l.b16 %v364
    %v500 = vunpack.c.l.b16 %v365
    %v501 = vunpack.c.l.b16 %v366
    %v502 = vunpack.c.l.b16 %v367
    %v503 = vunpack.c.l.b16 %v368
    %v504 = vunpack.c.l.b16 %v369
    %v505 = vunpack.c.l.b16 %v370
    %v506 = vunpack.c.l.b16 %v371
    %v507 = vunpack.c.l.b16 %v372
    %v508 = vunpack.c.l.b16 %v373
    %v509 = vunpack.c.l.b16 %v374
    %v510 = vunpack.c.l.b16 %v375
    %v511 = vunpack.c.l.b16 %v376
    %v512 = vunpack.c.l.b16 %v377
    %v513 = vunpack.c.l.b16 %v378
    %v514 = vunpack.c.l.b16 %v379
    %v515 = vunpack.c.l.b16 %v380
    %v516 = vunpack.c.l.b16 %v381
    %v517 = vunpack.c.l.b16 %v382
    %v518 = vunpack.c.l.b16 %v383
    %v519 = vunpack.c.l.b16 %v384
    %v520 = vunpack.c.l.b16 %v385
    %v521 = vunpack.c.l.b16 %v386
    %v522 = vunpack.c.l.b16 %v387
    %v523 = vunpack.c.l.b16 %v388
    %v524 = vunpack.c.l.b16 %v389
    %v525 = vunpack.c.l.b16 %v390
    %v526 = vpack.c.b16 %v463, %v462
    %v527 = vpack.c.b16 %v465, %v464
    %v528 = vpack.c.b16 %v467, %v466
    %v529 = vpack.c.b16 %v469, %v468
    %v530 = vpack.c.b16 %v471, %v470
    %v531 = vpack.c.b16 %v473, %v472
    %v532 = vpack.c.b16 %v475, %v474
    %v533 = vpack.c.b16 %v477, %v476
    %v534 = vpack.c.b16 %v479, %v478
    %v535 = vpack.c.b16 %v481, %v480
    %v536 = vpack.c.b16 %v483, %v482
    %v537 = vpack.c.b16 %v485, %v484
    %v538 = vpack.c.b16 %v487, %v486
    %v539 = vpack.c.b16 %v489, %v488
    %v540 = vpack.c.b16 %v491, %v490
    %v541 = vpack.c.b16 %v493, %v492
    %v542 = vpack.c.b16 %v495, %v494
    %v543 = vpack.c.b16 %v497, %v496
    %v544 = vpack.c.b16 %v499, %v498
    %v545 = vpack.c.b16 %v501, %v500
    %v546 = vpack.c.b16 %v503, %v502
    %v547 = vpack.c.b16 %v505, %v504
    %v548 = vpack.c.b16 %v507, %v506
    %v549 = vpack.c.b16 %v509, %v508
    %v550 = vpack.c.b16 %v511, %v510
    %v551 = vpack.c.b16 %v513, %v512
    %v552 = vpack.c.b16 %v515, %v514
    %v553 = vpack.c.b16 %v517, %v516
    %v554 = vpack.c.b16 %v519, %v518
    %v555 = vpack.c.b16 %v521, %v520
    %v556 = vpack.c.b16 %v523, %v522
    %v557 = vpack.c.b16 %v525, %v524
    %590 = vmatprep.subr.bf16.mxu0 0
    %591 = vmatpush1.bf16.msra.mxu0 %v533
    %592 = vmatprep.subr.bf16.mxu0 0
    %593 = vmatpush1.bf16.msra.mxu0 %v532
    %594 = vmatprep.subr.bf16.mxu0 0
    %595 = vmatpush1.bf16.msra.mxu0 %v531
    %596 = vmatprep.subr.bf16.mxu0 0
    %597 = vmatpush1.bf16.msra.mxu0 %v530
    %598 = vmatprep.subr.bf16.mxu0 0
    %599 = vmatpush1.bf16.msra.mxu0 %v529
    %600 = vmatprep.subr.bf16.mxu0 0
    %601 = vmatpush1.bf16.msra.mxu0 %v528
    %602 = vmatprep.subr.bf16.mxu0 0
    %603 = vmatpush1.bf16.msra.mxu0 %v527
    %604 = vmatprep.subr.bf16.mxu0 0
    %605 = vmatpush1.bf16.msra.mxu0 %v526
    %606 = vmatprep.subr.bf16.mxu0 0
    %607 = vmatpush2.bf16.msra.mxu0 %v541
    %608 = vmatprep.subr.bf16.mxu0 0
    %609 = vmatpush2.bf16.msra.mxu0 %v540
    %610 = vmatprep.subr.bf16.mxu0 0
    %611 = vmatpush2.bf16.msra.mxu0 %v539
    %612 = vmatprep.subr.bf16.mxu0 0
    %613 = vmatpush2.bf16.msra.mxu0 %v538
    %614 = vmatprep.subr.bf16.mxu0 0
    %615 = vmatpush2.bf16.msra.mxu0 %v537
    %616 = vmatprep.subr.bf16.mxu0 0
    %617 = vmatpush2.bf16.msra.mxu0 %v536
    %618 = vmatprep.subr.bf16.mxu0 0
    %619 = vmatpush2.bf16.msra.mxu0 %v535
    %620 = vmatprep.subr.bf16.mxu0 0
    %621 = vmatpush2.bf16.msra.mxu0 %v534
    %622 = vmatprep.mubr.bf16.mxu0 %v324
    %623 = vmatmul.mubr.bf16.gmra.mxu0 %v323
    %v624 = vpop.f32.mrf.mxu0
    %v625 = vadd.f32 %v396, %v624
    %v626 = vpop.f32.mrf.mxu0
    %v627 = vpop.f32.mrf.mxu0
    %v628 = vpop.f32.mrf.mxu0
    %629 = vdwg.mxu0
    %630 = vmatprep.subr.bf16.mxu0 0
    %631 = vmatpush1.bf16.msra.mxu0 %v549
    %632 = vmatprep.subr.bf16.mxu0 0
    %633 = vmatpush1.bf16.msra.mxu0 %v548
    %634 = vmatprep.subr.bf16.mxu0 0
    %635 = vmatpush1.bf16.msra.mxu0 %v547
    %636 = vmatprep.subr.bf16.mxu0 0
    %637 = vmatpush1.bf16.msra.mxu0 %v546
    %638 = vmatprep.subr.bf16.mxu0 0
    %639 = vmatpush1.bf16.msra.mxu0 %v545
    %640 = vmatprep.subr.bf16.mxu0 0
    %641 = vmatpush1.bf16.msra.mxu0 %v544
    %642 = vmatprep.subr.bf16.mxu0 0
    %643 = vmatpush1.bf16.msra.mxu0 %v543
    %644 = vmatprep.subr.bf16.mxu0 0
    %645 = vmatpush1.bf16.msra.mxu0 %v542
    %646 = vmatprep.subr.bf16.mxu0 0
    %647 = vmatpush2.bf16.msra.mxu0 %v557
    %648 = vmatprep.subr.bf16.mxu0 0
    %649 = vmatpush2.bf16.msra.mxu0 %v556
    %650 = vmatprep.subr.bf16.mxu0 0
    %651 = vmatpush2.bf16.msra.mxu0 %v555
    %652 = vmatprep.subr.bf16.mxu0 0
    %653 = vmatpush2.bf16.msra.mxu0 %v554
    %654 = vmatprep.subr.bf16.mxu0 0
    %655 = vmatpush2.bf16.msra.mxu0 %v553
    %656 = vmatprep.subr.bf16.mxu0 0
    %657 = vmatpush2.bf16.msra.mxu0 %v552
    %658 = vmatprep.subr.bf16.mxu0 0
    %659 = vmatpush2.bf16.msra.mxu0 %v551
    %660 = vmatprep.subr.bf16.mxu0 0
    %661 = vmatpush2.bf16.msra.mxu0 %v550
    %662 = vmatprep.mubr.bf16.mxu0 %v326
    %663 = vmatmul.mubr.bf16.gmra.mxu0 %v325
    %v664 = vpop.f32.mrf.mxu0
    %v665 = vadd.f32 %v625, %v664
    %v666 = vpop.f32.mrf.mxu0
    %v667 = vpop.f32.mrf.mxu0
    %v668 = vpop.f32.mrf.mxu0
    %669 = vdwg.mxu0
    %670 = vst [vmem:[#allocation2] sm:$0xff] %v665
    // Predicated region
    $region22: #{feed_forward.1} parent=1 // pred_check
      _
    $region23: #{feed_forward.1} parent=1 // pred_check_branch
      %672 = sbr.rel (0) target = $region25
    $region24: #{feed_forward.1} parent=1 // pred_region
      // Predicated region
      $region26: #{feed_forward.1} parent=24 // pred_check
        _
      $region27: #{feed_forward.1} parent=24 // pred_check_branch
        %674 = sbr.rel (0) target = $region29
      $region28: #{feed_forward.1} parent=24 // pred_region
        // Predicated region
        $region30: #{feed_forward.1} parent=28 // pred_check
          _
        $region31: #{feed_forward.1} parent=28 // pred_check_branch
          %676 = sbr.rel target = $region33
        $region32: #{feed_forward.1} parent=28 // pred_region
          // Predicated region
          $region45: #{feed_forward.1} parent=32 // pred_check
            _
          $region46: #{feed_forward.1} parent=32 // pred_check_branch
            %692 = sbr.rel (0) target = $region48
          $region47: #{feed_forward.1} parent=32 // pred_region
            %s694 = ssub.s32 16, 1
            loop: start=0, step=1, limit=1
            $region49: #{feed_forward.1} parent=47 // loop_pre_header
              _
            $region50: #{feed_forward.1} parent=47 // loop_header
              %s696 = sphi 0, %s700
              %p697 = scmp.ge.s32.totalorder %s696, 1
              %s701 = sphi [#allocation2], [#allocation2]
              %s702 = sphi %s5, %s5
            $region51: #{feed_forward.1} parent=47 // loop_header_branch
              %699 = sbr.rel (%p697) target = $region55
            $region52: #{feed_forward.1} parent=47 // loop_body
              %v703 = vld [vmem:[%s701] sm:%s694]
              %704 = vst [vmem:[%s702] sm:%s694] %v703
            $region53: #{feed_forward.1} parent=47 // loop_footer
              %s700 = sadd.s32 1, %s696
            $region54: #{feed_forward.1} parent=47 // loop_footer_branch
              %695 = sbr.rel target = $region50
            $region55: #{feed_forward.1} parent=47 // loop_exit
              _
          $region48: #{feed_forward.1} parent=32 // pred_fallthru
            _
        $region33: #{feed_forward.1} parent=28 // pred_fallthru
          _
        // Predicated region
        $region34: #{feed_forward.1} parent=28 // pred_check
          _
        $region35: #{feed_forward.1} parent=28 // pred_check_branch
          %678 = sbr.rel (0) target = $region37
        $region36: #{feed_forward.1} parent=28 // pred_region
          %s680 = ssub.s32 16, 1
          loop: start=0, step=1, limit=1
          $region38: #{feed_forward.1} parent=36 // loop_pre_header
            _
          $region39: #{feed_forward.1} parent=36 // loop_header
            %s682 = sphi 0, %s686
            %p683 = scmp.ge.s32.totalorder %s682, 1
            %s687 = sphi [#allocation2], [#allocation2]
            %s688 = sphi %s5, %s5
          $region40: #{feed_forward.1} parent=36 // loop_header_branch
            %685 = sbr.rel (%p683) target = $region44
          $region41: #{feed_forward.1} parent=36 // loop_body
            %v689 = vld [vmem:[%s687] sm:%s680]
            %690 = vst [vmem:[%s688] sm:%s680] %v689
          $region42: #{feed_forward.1} parent=36 // loop_footer
            %s686 = sadd.s32 1, %s682
          $region43: #{feed_forward.1} parent=36 // loop_footer_branch
            %681 = sbr.rel target = $region39
          $region44: #{feed_forward.1} parent=36 // loop_exit
            _
        $region37: #{feed_forward.1} parent=28 // pred_fallthru
          _
      $region29: #{feed_forward.1} parent=24 // pred_fallthru
        _
      %705 = vnop
    $region25: #{feed_forward.1} parent=1 // pred_fallthru
      _
    // Predicated region
    $region56: #{feed_forward.1} parent=1 // pred_check
      _
    $region57: #{feed_forward.1} parent=1 // pred_check_branch
      %707 = sbr.rel (0) target = $region59
    $region58: #{feed_forward.1} parent=1 // pred_region
      _
    $region59: #{feed_forward.1} parent=1 // pred_fallthru
      _

</llo_original>
